<compile_context>
chip_gen: v7x
topology: tpu7x:2x2x1
jax: 0.10.0
libtpu: 0.0.40
codegen_flags: <defaults>
</compile_context>

<pallas_src>
import jax
import jax.numpy as jnp
from jax.experimental import pallas as pl
from jax.experimental.pallas import tpu as pltpu


# ------------------------------ Pallas kernel -------------------------------

def conv1x1_bn_relu_kernel(w_ref, b_ref, x_ref, o_ref):
    # w_ref: (Cout, Cin)  bf16 weights with BN scale folded in; VMEM-resident
    # b_ref: (Cout, 1)    f32 folded BN bias (beta - mean * scale); resident
    # x_ref: (Cin, TM)    f32 activation tile (batch dim squeezed, pixels on lanes)
    # o_ref: (Cout, TM)   f32 output tile (lane-dense stores)
    x_bf = x_ref[...].astype(jnp.bfloat16)          # in-kernel cast: no extra HBM pass
    acc = jnp.dot(w_ref[...], x_bf, preferred_element_type=jnp.float32)
    o_ref[...] = jnp.maximum(acc + b_ref[...], 0.0).astype(o_ref.dtype)


# ------------------------------- wrapper -------------------------------------

def _round_down_mult(a, m):
    return (a // m) * m


def _choose_tile(hw, cin, cout, tile_m, vmem_budget_bytes=12 * 1024 * 1024):
    """Pick a pixel-tile TM that divides H*W, is a multiple of 128, and keeps the
    double-buffered f32 in/out tiles (2 * 4 * (Cin + Cout) * TM bytes) well under
    the scoped VMEM budget on every TPU generation (incl. v7x's 64 MiB VMEM)."""
    cap = vmem_budget_bytes // (2 * 4 * (cin + cout))
    cap = max(128, _round_down_mult(cap, 128))
    cap = min(cap, max(128, _round_down_mult(tile_m, 128)))
    if hw % 128 == 0:
        k = hw // 128
        best = 1
        d = 1
        while d * d <= k:
            if k % d == 0:
                for dd in (d, k // d):
                    if 128 * dd <= cap and dd > best:
                        best = dd
            d += 1
        return 128 * best
    # Fallback: one full-row tile per image (block dim == full array dim, so the
    # (8,128) divisibility rule does not apply).
    return hw


def conv_bn_relu(x_nchw, weight, gamma, beta, running_mean, running_var,
                 eps=1e-5, tile_m=8192):
    """Fused 1x1 Conv (bias=False) + BatchNorm2d (eval mode) + ReLU.

    x_nchw : (N, Cin, H, W) f32
    weight : (Cout, Cin, 1, 1) f32 (PyTorch layout)
    gamma/beta/running_mean/running_var : (Cout,) f32
    returns: (N, Cout, H, W) f32
    """
    N, Cin, H, W = x_nchw.shape
    Cout = weight.shape[0]
    HW = H * W

    # Fold inference-mode BN into the conv: y = (scale * W) @ x + bias.
    scale = gamma / jnp.sqrt(running_var + eps)
    bias = (beta - running_mean * scale).astype(jnp.float32).reshape(Cout, 1)
    w_folded = (weight.reshape(Cout, Cin) * scale[:, None]).astype(jnp.bfloat16)

    # NCHW-native: collapsing H,W is a free view; no transposes, no pad, no cast.
    x3d = x_nchw.reshape(N, Cin, HW)

    TM = _choose_tile(HW, Cin, Cout, tile_m)
    grid = (N, pl.cdiv(HW, TM))

    out = pl.pallas_call(
        conv1x1_bn_relu_kernel,
        out_shape=jax.ShapeDtypeStruct((N, Cout, HW), x_nchw.dtype),
        grid=grid,
        in_specs=[
            pl.BlockSpec((Cout, Cin), lambda n, i: (0, 0)),      # weights: resident
            pl.BlockSpec((Cout, 1), lambda n, i: (0, 0)),        # BN bias: resident
            pl.BlockSpec((None, Cin, TM), lambda n, i: (n, 0, i)),  # activations
        ],
        out_specs=pl.BlockSpec((None, Cout, TM), lambda n, i: (n, 0, i)),
        compiler_params=pltpu.CompilerParams(
            dimension_semantics=("parallel", "parallel"),
        ),
    )(w_folded, bias, x3d)

    return out.reshape(N, Cout, H, W)


# ------------------------------ reference ------------------------------------

def conv_bn_relu_ref(x_nchw, weight, gamma, beta, running_mean, running_var, eps=1e-5):
    w2d = weight.reshape(weight.shape[0], weight.shape[1])
    y = jnp.einsum('oc,nchw->nohw', w2d, x_nchw)
    scale = gamma / jnp.sqrt(running_var + eps)
    bias = beta - running_mean * scale
    y = y * scale[None, :, None, None] + bias[None, :, None, None]
    return jnp.maximum(y, 0.0)


# --------------------------------- main ---------------------------------------

if __name__ == "__main__":
    key = jax.random.PRNGKey(0)
    N, Cin, Cout, S = 2, 4, 32, 16

    k_x, k_w, k_g, k_b, k_m, k_v = jax.random.split(key, 6)
    x = jax.random.normal(k_x, (N, Cin, S, S), jnp.float32)
    weight = jax.random.normal(k_w, (Cout, Cin, 1, 1), jnp.float32) * 0.25
    gamma = 1.0 + 0.1 * jax.random.normal(k_g, (Cout,), jnp.float32)
    beta = 0.1 * jax.random.normal(k_b, (Cout,), jnp.float32)
    running_mean = 0.1 * jax.random.normal(k_m, (Cout,), jnp.float32)
    running_var = 1.0 + 0.1 * jax.nn.softplus(jax.random.normal(k_v, (Cout,), jnp.float32))

    out = conv_bn_relu(x, weight, gamma, beta, running_mean, running_var)
    out = jax.block_until_ready(out)

    ref = conv_bn_relu_ref(x, weight, gamma, beta, running_mean, running_var)

    assert out.shape == (N, Cout, S, S), out.shape
    assert bool(jnp.all(jnp.isfinite(out)))
    # bf16 MXU inputs -> relaxed tolerance
    assert bool(jnp.allclose(out, ref, rtol=2e-2, atol=2e-2)), float(jnp.max(jnp.abs(out - ref)))

    print("KERNEL_OK")
</pallas_src>

<mosaic_0001>
module attributes {stable_mosaic.version = 11 : i64} {
  func.func @conv1x1_bn_relu_kernel(%arg0: i32, %arg1: i32, %arg2: memref<32x4xbf16, #tpu.memory_space<vmem>>, %arg3: memref<32x1xf32, #tpu.memory_space<vmem>>, %arg4: memref<1x4x256xf32, #tpu.memory_space<vmem>>, %arg5: memref<1x32x256xf32, #tpu.memory_space<vmem>>) attributes {dimension_semantics = [#tpu.dimension_semantics<parallel>, #tpu.dimension_semantics<parallel>], iteration_bounds = array<i64: 2, 1>, scalar_prefetch = 0 : i64, scratch_operands = 0 : i64, tpu.core_type = #tpu.core_type<tc>, window_params = [{pipeline_mode = #tpu.pipeline_mode<synchronous>, transform_indices = @transform_0, window_bounds = array<i64: 32, 4>}, {pipeline_mode = #tpu.pipeline_mode<synchronous>, transform_indices = @transform_1, window_bounds = array<i64: 32, 1>}, {transform_indices = @transform_2, window_bounds = array<i64: 1, 4, 256>}, {transform_indices = @transform_3, window_bounds = array<i64: 1, 32, 256>}]} {
    %c0 = arith.constant 0 : index
    %c0_0 = arith.constant 0 : index
    %c0_1 = arith.constant 0 : index
    %0 = vector.load %arg4[%c0, %c0_0, %c0_1] : memref<1x4x256xf32, #tpu.memory_space<vmem>>, vector<1x4x256xf32>
    %1 = vector.shape_cast %0 : vector<1x4x256xf32> to vector<4x256xf32>
    %2 = arith.truncf %1 : vector<4x256xf32> to vector<4x256xbf16>
    %c0_2 = arith.constant 0 : index
    %c0_3 = arith.constant 0 : index
    %3 = vector.load %arg2[%c0_2, %c0_3] : memref<32x4xbf16, #tpu.memory_space<vmem>>, vector<32x4xbf16>
    %cst = arith.constant dense<0.000000e+00> : vector<32x256xf32>
    %4 = tpu.matmul %3, %2, %cst {dimension_numbers = #tpu.dot_dimension_numbers<[1], [0], [0], [1], [0, 0, 1, 1], [], []>} : vector<32x4xbf16>, vector<4x256xbf16>, vector<32x256xf32> -> vector<32x256xf32>
    %c0_4 = arith.constant 0 : index
    %c0_5 = arith.constant 0 : index
    %5 = vector.load %arg3[%c0_4, %c0_5] : memref<32x1xf32, #tpu.memory_space<vmem>>, vector<32x1xf32>
    %6 = vector.broadcast %5 : vector<32x1xf32> to vector<32x256xf32>
    %7 = arith.addf %4, %6 : vector<32x256xf32>
    %cst_6 = arith.constant 0.000000e+00 : f32
    %8 = vector.broadcast %cst_6 : f32 to vector<32x256xf32>
    %9 = arith.maximumf %7, %8 : vector<32x256xf32>
    %c0_7 = arith.constant 0 : index
    %c0_8 = arith.constant 0 : index
    %c0_9 = arith.constant 0 : index
    %10 = vector.load %arg5[%c0_7, %c0_8, %c0_9] : memref<1x32x256xf32, #tpu.memory_space<vmem>>, vector<1x32x256xf32>
    %11 = vector.shape_cast %10 : vector<1x32x256xf32> to vector<32x256xf32>
    %12 = vector.shape_cast %9 : vector<32x256xf32> to vector<1x32x256xf32>
    tpu.vector_store %arg5[%c0_7, %c0_8, %c0_9], %12 {strides = array<i32>} : memref<1x32x256xf32, #tpu.memory_space<vmem>>, vector<1x32x256xf32>,
    return
  }
  func.func @transform_0(%arg0: i32, %arg1: i32) -> (i32, i32) {
    %c0_i32 = arith.constant 0 : i32
    %c0_i32_0 = arith.constant 0 : i32
    %c0_i32_1 = arith.constant 0 : i32
    return %c0_i32, %c0_i32_0 : i32, i32
  }
  func.func @transform_1(%arg0: i32, %arg1: i32) -> (i32, i32) {
    %c0_i32 = arith.constant 0 : i32
    %c0_i32_0 = arith.constant 0 : i32
    %c0_i32_1 = arith.constant 0 : i32
    return %c0_i32, %c0_i32_0 : i32, i32
  }
  func.func @transform_2(%arg0: i32, %arg1: i32) -> (i32, i32, i32) {
    %c0_i32 = arith.constant 0 : i32
    %c0_i32_0 = arith.constant 0 : i32
    return %arg0, %c0_i32, %arg1 : i32, i32, i32
  }
  func.func @transform_3(%arg0: i32, %arg1: i32) -> (i32, i32, i32) {
    %c0_i32 = arith.constant 0 : i32
    %c0_i32_0 = arith.constant 0 : i32
    return %arg0, %c0_i32, %arg1 : i32, i32, i32
  }
}

</mosaic_0001>

<llo_original>
// kernel: tpu_custom_call.1
$region0: #{tpu_custom_call.1}
  #allocation0 [shape = 'u32[]', space=smem, size = 0x4, offset = 0x4, fixed_abs, tag = 'smem constant byte address 0x4 - core index']
  #allocation1 [shape = 'u32[144,128]{1,0:T(1,128)}', space=vmem, size = 0x12000, scoped, tag = 'internal scratch']
  %s0 = inlined_call_operand.vmem [shape: bf16[32,4], index: 0, kind: input, shape index: {}]
  %s1 = inlined_call_operand.vmem [shape: f32[32,1], index: 1, kind: input, shape index: {}]
  %s2 = inlined_call_operand.vmem [shape: f32[2,4,256], index: 2, kind: input, shape index: {}]
  %s3 = inlined_call_operand.hbm [shape: f32[2,32,256], index: 3, kind: output, shape index: {}]
  %s4 = sld [smem:[#allocation0]]
  $region45: #{tpu_custom_call.1} parent=0
    _
  %s6 = ssub.s32 1, %s4
  %s7 = scalar_select 0, %s6, %s4
  $region1: #{tpu_custom_call.1} parent=0
    #allocation2 [shape = 'u8[65536]{0}', space=vmem, size = 0x10000, scoped, tag = 'output window, operand 0']
    #allocation3 [shape = 's32[2]{0}', space=sflag, size = 0x8, scoped, tag = 'scoped memory for tpu_custom_call.1']
    %8 = vsyncpa [#allocation3], 0
    %s9 = scalar_lea.sflag [#allocation3], 1
    %10 = vsyncpa %s9, 0
    loop: start=0, step=1, limit=4
    $region2: #{tpu_custom_call.1} parent=1 // loop_pre_header
      _
    $region3: #{tpu_custom_call.1} parent=1 // loop_header
      %s12 = sphi 0, %s16
      %p13 = scmp.ge.s32.totalorder %s12, 4
      %s19 = sphi 0, %s31
      %s20 = sphi 0, %s27
      %s21 = sphi 0, %s19
      %s22 = sphi 0, %s20
      %s23 = sphi 0, %s21
      %s24 = sphi 0, %s22
      %s32 = sphi 0, %s32
      %s34 = sphi 0, %s32
      %s35 = sphi 0, %s34
      %s49 = sphi 0, %s35
      %s53 = sphi 0, %s53
      %s55 = sphi 0, %s53
      %s56 = sphi 0, %s55
      %s70 = sphi 0, %s56
      %s78 = sphi 0, %s80
      %s81 = sphi 0, %s78
      %s82 = sphi 0, %s81
      %s98 = sphi 0, %s82
      %s106 = sphi 0, %s108
      %s109 = sphi 0, %s106
      %s110 = sphi 0, %s109
      %s126 = sphi 0, %s110
    $region4: #{tpu_custom_call.1} parent=1 // loop_header_branch
      %15 = sbr.rel (%p13) target = $region8
    $region5: #{tpu_custom_call.1} parent=1 // loop_body
      %s17 = ssub.s32 %s12, 1
      %s18 = ssub.s32 %s12, 2
      %s25 = sadd.s32 1, %s20
      %p26 = scmp.ge.s32.totalorder %s25, 1
      %s27 = scalar_select %p26, 0, %s25
      %s28 = sadd.s32 1, %s19
      %s29 = scalar_select %p26, %s28, %s19
      %p30 = scmp.ge.s32.totalorder %s29, 2
      %s31 = scalar_select %p30, 0, %s29
      %s33 = sadd.s32 %s32, 1
      %p36 = scmp.eq.s32.totalorder %s12, 1
      %p37 = scmp.ne.s32.totalorder %s32, %s34
      %p38 = scmp.eq.s32.totalorder %s12, 0
      %p39 = por %p37, %p38
      %p40 = scmp.ne.s32.totalorder %s32, %s34
      %p41 = scmp.eq.s32.totalorder %s17, 1
      %p42 = por %p40, %p41
      %p43 = scmp.ne.s32.totalorder %s34, %s35
      %p44 = scmp.eq.s32.totalorder %s17, 0
      %p45 = por %p43, %p44
      %p46 = scmp.ne.s32.totalorder %s34, %s35
      %p47 = scmp.eq.s32.totalorder %s18, 1
      %p48 = por %p46, %p47
      %p50 = scmp.ne.s32.totalorder %s35, %s49
      %p51 = scmp.eq.s32.totalorder %s18, 0
      %p52 = por %p50, %p51
      %s54 = sadd.s32 %s53, 1
      %p57 = scmp.eq.s32.totalorder %s12, 1
      %p58 = scmp.ne.s32.totalorder %s53, %s55
      %p59 = scmp.eq.s32.totalorder %s12, 0
      %p60 = por %p58, %p59
      %p61 = scmp.ne.s32.totalorder %s53, %s55
      %p62 = scmp.eq.s32.totalorder %s17, 1
      %p63 = por %p61, %p62
      %p64 = scmp.ne.s32.totalorder %s55, %s56
      %p65 = scmp.eq.s32.totalorder %s17, 0
      %p66 = por %p64, %p65
      %p67 = scmp.ne.s32.totalorder %s55, %s56
      %p68 = scmp.eq.s32.totalorder %s18, 1
      %p69 = por %p67, %p68
      %p71 = scmp.ne.s32.totalorder %s56, %s70
      %p72 = scmp.eq.s32.totalorder %s18, 0
      %p73 = por %p71, %p72
      %s74 = ssub.s32 %s19, %s31
      %s75 = ssub.s32 %s20, %s27
      %s76 = sor.u32 %s74, %s75
      %p77 = scmp.eq.s32.totalorder %s76, 0
      %s79 = sadd.s32 %s78, 1
      %s80 = scalar_select %p77, %s78, %s79
      %p83 = pneg %p77
      %p84 = scmp.eq.s32.totalorder %s12, 1
      %p85 = por %p83, %p84
      %p86 = scmp.ne.s32.totalorder %s78, %s81
      %p87 = scmp.eq.s32.totalorder %s12, 0
      %p88 = por %p86, %p87
      %p89 = scmp.ne.s32.totalorder %s78, %s81
      %p90 = scmp.eq.s32.totalorder %s17, 1
      %p91 = por %p89, %p90
      %p92 = scmp.ne.s32.totalorder %s81, %s82
      %p93 = scmp.eq.s32.totalorder %s17, 0
      %p94 = por %p92, %p93
      %p95 = scmp.ne.s32.totalorder %s81, %s82
      %p96 = scmp.eq.s32.totalorder %s18, 1
      %p97 = por %p95, %p96
      %p99 = scmp.ne.s32.totalorder %s82, %s98
      %p100 = scmp.eq.s32.totalorder %s18, 0
      %p101 = por %p99, %p100
      %s102 = ssub.s32 %s19, %s31
      %s103 = ssub.s32 %s20, %s27
      %s104 = sor.u32 %s102, %s103
      %p105 = scmp.eq.s32.totalorder %s104, 0
      %s107 = sadd.s32 %s106, 1
      %s108 = scalar_select %p105, %s106, %s107
      %p111 = pneg %p105
      %p112 = scmp.eq.s32.totalorder %s12, 1
      %p113 = por %p111, %p112
      %p114 = scmp.ne.s32.totalorder %s106, %s109
      %p115 = scmp.eq.s32.totalorder %s12, 0
      %p116 = por %p114, %p115
      %p117 = scmp.ne.s32.totalorder %s106, %s109
      %p118 = scmp.eq.s32.totalorder %s17, 1
      %p119 = por %p117, %p118
      %p120 = scmp.ne.s32.totalorder %s109, %s110
      %p121 = scmp.eq.s32.totalorder %s17, 0
      %p122 = por %p120, %p121
      %p123 = scmp.ne.s32.totalorder %s109, %s110
      %p124 = scmp.eq.s32.totalorder %s18, 1
      %p125 = por %p123, %p124
      %p127 = scmp.ne.s32.totalorder %s110, %s126
      %p128 = scmp.eq.s32.totalorder %s18, 0
      %p129 = por %p127, %p128
      %p130 = scmp.le.s32.totalorder 1, %s12
      %p131 = scmp.lt.s32.totalorder %s12, 3
      %p132 = pnand %p130, %p131
      %p133 = pneg %p132
      // Predicated region
      $region9: #{tpu_custom_call.1} parent=5 // pred_check
        _
      $region10: #{tpu_custom_call.1} parent=5 // pred_check_branch
        %135 = sbr.rel (%p132) target = $region12
      $region11: #{tpu_custom_call.1} parent=5 // pred_region
        %s136 = ssub.s32 %s12, 1
        // Predicated region
        $region13: #{tpu_custom_call.1} parent=11 // pred_check
          %p137 = pneg %p45
        $region14: #{tpu_custom_call.1} parent=11 // pred_check_branch
          %139 = sbr.rel (%p137) target = $region16
        $region15: #{tpu_custom_call.1} parent=11 // pred_region
          _
        $region16: #{tpu_custom_call.1} parent=11 // pred_fallthru
          _
        // Predicated region
        $region17: #{tpu_custom_call.1} parent=11 // pred_check
          %p140 = pneg %p66
        $region18: #{tpu_custom_call.1} parent=11 // pred_check_branch
          %142 = sbr.rel (%p140) target = $region20
        $region19: #{tpu_custom_call.1} parent=11 // pred_region
          _
        $region20: #{tpu_custom_call.1} parent=11 // pred_fallthru
          _
      $region12: #{tpu_custom_call.1} parent=5 // pred_fallthru
        _
      %p143 = scmp.lt.s32.totalorder %s12, 2
      // Predicated region
      $region21: #{tpu_custom_call.1} parent=5 // pred_check
        %p144 = pneg %p143
      $region22: #{tpu_custom_call.1} parent=5 // pred_check_branch
        %146 = sbr.rel (%p144) target = $region24
      $region23: #{tpu_custom_call.1} parent=5 // pred_region
        // Predicated region
        $region25: #{tpu_custom_call.1} parent=23 // pred_check
          %p147 = pneg %p88
        $region26: #{tpu_custom_call.1} parent=23 // pred_check_branch
          %149 = sbr.rel (%p147) target = $region28
        $region27: #{tpu_custom_call.1} parent=23 // pred_region
          %s150 = smul.u32 2, %s20
          %p151 = scmp.lt.s32.totalorder %s19, 1
          %s152 = scalar_select %p151, %s19, 1
          %p153 = scmp.lt.s32.totalorder %s150, 1
          %s154 = scalar_select %p153, %s150, 1
          %s155 = smul.addr %s152, 2
          %s156 = sadd.s32 %s154, %s155
          %s157 = smul.addr %s156, 4
          %s158 = scalar_lea.vmem %s2, %s157
          %s159 = smul.u32 2, %s20
        $region28: #{tpu_custom_call.1} parent=23 // pred_fallthru
          _
      $region24: #{tpu_custom_call.1} parent=5 // pred_fallthru
        _
      %p160 = scmp.le.s32.totalorder 1, %s12
      %p161 = scmp.lt.s32.totalorder %s12, 3
      %p162 = pnand %p160, %p161
      %p163 = pneg %p162
      // Predicated region
      $region29: #{tpu_custom_call.1} parent=5 // pred_check
        _
      $region30: #{tpu_custom_call.1} parent=5 // pred_check_branch
        %165 = sbr.rel (%p162) target = $region32
      $region31: #{tpu_custom_call.1} parent=5 // pred_region
        %s166 = ssub.s32 %s12, 1
        %p167 = pneg %p45
        %p168 = pneg %p42
        %p169 = pneg %p66
        %p170 = pneg %p63
        %s171 = smul.u32 2, %s22
        %p172 = scmp.lt.s32.totalorder %s21, 1
        %s173 = scalar_select %p172, %s21, 1
        %p174 = scmp.lt.s32.totalorder %s171, 1
        %s175 = scalar_select %p174, %s171, 1
        %s176 = smul.addr %s173, 2
        %s177 = sadd.s32 %s175, %s176
        %s178 = smul.addr %s177, 4
        %s179 = scalar_lea.vmem %s2, %s178
        %p180 = pneg %p94
        %p181 = pneg %p91
        %p182 = pneg %p122
        %p183 = pneg %p119
        %s184 = sand.u32 %s109, 1
        %s185 = scalar_lea.sflag [#allocation3], %s184
        %s186 = sand.u32 %s109, 1
        %s187 = smul.addr %s186, 64
        %s188 = scalar_lea.vmem [#allocation2], %s187
        %s189 = smul.u32 2, %s22
        %p190 = scmp.lt.s32.totalorder %s21, 1
        %s191 = scalar_select %p190, %s21, 1
        %p192 = scmp.lt.s32.totalorder %s189, 1
        %s193 = scalar_select %p192, %s189, 1
        %s194 = smul.addr %s191, 2
        %s195 = sadd.s32 %s193, %s194
        %s196 = smul.addr %s195, 4
        %s197 = scalar_lea.vmem %s2, %s196
        %s198 = smul.u32 2, %s22
        %s199 = smul.u32 2, %s22
        %v201 = vld [vmem:[%s197] sm:$0xff]
        %v203 = vcombine.high %v201, %v201
        %v205 = vpack.c.bf16 %v201, %v201
        %v206 = vpack.c.bf16 %v203, %v203
        %v207 = vld [vmem:[%s0] sm:$0xf]
        %v208 = vld [vmem:[%s0 + $0x4] sm:$0xf]
        %v209 = vld [vmem:[%s0 + $0x8] sm:$0xf]
        %v210 = vld [vmem:[%s0 + $0xc] sm:$0xf]
        %v211 = vld [vmem:[%s1] sm:$0xff]
        %v212 = vld [vmem:[%s1 + $0x8] sm:$0xff]
        %v213 = vld [vmem:[%s1 + $0x10] sm:$0xff]
        %v214 = vld [vmem:[%s1 + $0x18] sm:$0xff]
        %216 = vset.pattern.permute.xlu0 0
        %217 = vperm.xlu0 %216, %v211
        %v218 = vpop.permute.xlu0 %217
        %221 = vset.pattern.permute.xlu0 0
        %222 = vperm.xlu0 %221, %v212
        %v223 = vpop.permute.xlu0 %222
        %226 = vset.pattern.permute.xlu0 0
        %227 = vperm.xlu0 %226, %v213
        %v228 = vpop.permute.xlu0 %227
        %231 = vset.pattern.permute.xlu0 0
        %232 = vperm.xlu0 %231, %v214
        %v233 = vpop.permute.xlu0 %232
        %v239 = vunpack.c.l.b16 %v207
        %v240 = vunpack.c.l.b16 %v208
        %v241 = vunpack.c.l.b16 %v209
        %v242 = vunpack.c.l.b16 %v210
        %v243 = vpack.c.b16 %v240, %v239
        %v244 = vpack.c.b16 %v242, %v241
        %vm245 = vcmask 31744
        %v247 = vsel %vm245, %v243, 0
        %v250 = vsel %vm245, %v244, 0
        %vm252 = vcmask 1041408
        %v254 = vsel %vm252, %v205, 0
        %v257 = vsel %vm252, %v206, 0
        %259 = vmatprep.subr.bf16.mxu0 %v257
        %260 = vmatpush1.bf16.msra.mxu0 %v254
        %261 = vmatprep.subr.bf16.mxu0 0
        %262 = vmatpush1.bf16.msra.mxu0 0
        %263 = vmatprep.subr.bf16.mxu0 0
        %264 = vmatpush1.bf16.msra.mxu0 0
        %265 = vmatprep.subr.bf16.mxu0 0
        %266 = vmatpush1.bf16.msra.mxu0 0
        %267 = vmatprep.subr.bf16.mxu0 0
        %268 = vmatpush1.bf16.msra.mxu0 0
        %269 = vmatprep.subr.bf16.mxu0 0
        %270 = vmatpush1.bf16.msra.mxu0 0
        %271 = vmatprep.subr.bf16.mxu0 0
        %272 = vmatpush1.bf16.msra.mxu0 0
        %273 = vmatprep.subr.bf16.mxu0 0
        %274 = vmatpush1.bf16.msra.mxu0 0
        %275 = vmatprep.subr.bf16.mxu0 0
        %276 = vmatpush1.bf16.msra.mxu0 0
        %277 = vmatprep.subr.bf16.mxu0 0
        %278 = vmatpush1.bf16.msra.mxu0 0
        %279 = vmatprep.subr.bf16.mxu0 0
        %280 = vmatpush1.bf16.msra.mxu0 0
        %281 = vmatprep.subr.bf16.mxu0 0
        %282 = vmatpush1.bf16.msra.mxu0 0
        %283 = vmatprep.subr.bf16.mxu0 0
        %284 = vmatpush1.bf16.msra.mxu0 0
        %285 = vmatprep.subr.bf16.mxu0 0
        %286 = vmatpush1.bf16.msra.mxu0 0
        %287 = vmatprep.subr.bf16.mxu0 0
        %288 = vmatpush1.bf16.msra.mxu0 0
        %289 = vmatprep.subr.bf16.mxu0 0
        %290 = vmatpush1.bf16.msra.mxu0 0
        %291 = vmatprep.mubr.bf16.mxu0 0
        %292 = vmatmul.mubr.bf16.gmra.mrb[0].mxu0 %v247
        %v293 = vpop.f32.mrb[0].mxu0
        %v294 = vadd.f32 %v218, %v293
        %v295 = vpop.f32.mrb[0].mxu0
        %v296 = vadd.f32 %v218, %v295
        %v297 = vpop.f32.mrb[0].mxu0
        %v298 = vadd.f32 %v223, %v297
        %v299 = vpop.f32.mrb[0].mxu0
        %v300 = vadd.f32 %v223, %v299
        %301 = vmatprep.mubr.bf16.mxu0 0
        %302 = vmatmul.mubr.bf16.gmra.mrb[0].mxu0 %v250
        %v303 = vpop.f32.mrb[0].mxu0
        %v304 = vadd.f32 %v228, %v303
        %v305 = vpop.f32.mrb[0].mxu0
        %v306 = vadd.f32 %v228, %v305
        %v307 = vpop.f32.mrb[0].mxu0
        %v308 = vadd.f32 %v233, %v307
        %v309 = vpop.f32.mrb[0].mxu0
        %v310 = vadd.f32 %v233, %v309
        %311 = vdwg.mxu0
        %v312 = vmax.f32 %v294, 0.0
        %v313 = vmax.f32 %v296, 0.0
        %v314 = vmax.f32 %v298, 0.0
        %v315 = vmax.f32 %v300, 0.0
        %v316 = vmax.f32 %v304, 0.0
        %v317 = vmax.f32 %v306, 0.0
        %v318 = vmax.f32 %v308, 0.0
        %v319 = vmax.f32 %v310, 0.0
        %320 = vst [vmem:[%s188] sm:$0xff] %v312
        %321 = vst [vmem:[%s188 + $0x8] sm:$0xff] %v313
        %322 = vst [vmem:[%s188 + $0x10] sm:$0xff] %v314
        %323 = vst [vmem:[%s188 + $0x18] sm:$0xff] %v315
        %324 = vst [vmem:[%s188 + $0x20] sm:$0xff] %v316
        %325 = vst [vmem:[%s188 + $0x28] sm:$0xff] %v317
        %326 = vst [vmem:[%s188 + $0x30] sm:$0xff] %v318
        %327 = vst [vmem:[%s188 + $0x38] sm:$0xff] %v319
        %s328 = sand.u32 %s109, 1
        %s329 = scalar_lea.sflag [#allocation3], %s328
        %s330 = sand.u32 %s109, 1
        %s331 = smul.addr %s330, 64
        %s332 = scalar_lea.vmem [#allocation2], %s331
        // Predicated region
        $region33: #{tpu_custom_call.1} parent=31 // pred_check
          %p333 = pneg %p119
        $region34: #{tpu_custom_call.1} parent=31 // pred_check_branch
          %335 = sbr.rel (%p333) target = $region36
        $region35: #{tpu_custom_call.1} parent=31 // pred_region
          %s336 = smul.u32 2, %s22
          %s338 = ssub.s32 1024, 1024
          %339 = vsyncadd %s329, %s338
          %s340 = smul.addr %s21, 8
          %s341 = sadd.s32 %s336, %s340
          %s342 = smul.addr %s341, 128
          %s343 = scalar_lea.hbm %s3, %s342
          %s344 = sshll.u32 %s332, 4
          %s345 = int_to_ptr.vmem [resolvable:$true] %s344
          %350 = dma.vmem_to_hbm [thread:$0]  %s345, 1024, %s343, %s329, 256, 256, 16
        $region36: #{tpu_custom_call.1} parent=31 // pred_fallthru
          _
      $region32: #{tpu_custom_call.1} parent=5 // pred_fallthru
        _
      %p351 = scmp.le.s32.totalorder 2, %s12
      // Predicated region
      $region37: #{tpu_custom_call.1} parent=5 // pred_check
        %p352 = pneg %p351
      $region38: #{tpu_custom_call.1} parent=5 // pred_check_branch
        %354 = sbr.rel (%p352) target = $region40
      $region39: #{tpu_custom_call.1} parent=5 // pred_region
        %s355 = ssub.s32 %s12, 2
        // Predicated region
        $region41: #{tpu_custom_call.1} parent=39 // pred_check
          %p356 = pneg %p125
        $region42: #{tpu_custom_call.1} parent=39 // pred_check_branch
          %358 = sbr.rel (%p356) target = $region44
        $region43: #{tpu_custom_call.1} parent=39 // pred_region
          %s359 = sand.u32 %s110, 1
          %s360 = scalar_lea.sflag [#allocation3], %s359
          %s361 = sand.u32 %s110, 1
          %s362 = smul.addr %s361, 64
          %s363 = scalar_lea.vmem [#allocation2], %s362
          %364 = dma.done %s360, 1024
        $region44: #{tpu_custom_call.1} parent=39 // pred_fallthru
          _
      $region40: #{tpu_custom_call.1} parent=5 // pred_fallthru
        _
    $region6: #{tpu_custom_call.1} parent=1 // loop_footer
      %s16 = sadd.s32 1, %s12
    $region7: #{tpu_custom_call.1} parent=1 // loop_footer_branch
      %11 = sbr.rel target = $region3
    $region8: #{tpu_custom_call.1} parent=1 // loop_exit
      _
    %365 = vsyncpa [#allocation3], 1
    %s366 = scalar_lea.sflag [#allocation3], 1
    %367 = vsyncpa %s366, 1

</llo_original>
